<compile_context>
chip_gen: v6e
topology: v6e:2x2x1
jax: 0.10.0
libtpu: 0.0.40
codegen_flags: <defaults>
</compile_context>

<pallas_src>
import functools
import types

import jax
import jax.numpy as jnp
from jax import lax
from jax.experimental import pallas as pl
from jax.experimental.pallas import tpu as pltpu

# frequency / time division factors per tier (mirrors utils/constants in the repo)
f_div = {1: 1, 2: 1, 3: 2, 4: 2, 5: 4, 6: 4, 7: 8}
t_div = {1: 1, 2: 2, 3: 2, 4: 4, 5: 4, 6: 8, 7: 8}

BF16 = jnp.bfloat16


# ------------------------------------------------------------------------------ helpers
def _round_up(x, m):
    return ((x + m - 1) // m) * m


_BUDGET_CACHE = None


def _budgets():
    """Generation-aware VMEM / tiling budgets (v5e/v6e: 128 MiB VMEM; v7x-like: 64 MiB, 2 TCs)."""
    global _BUDGET_CACHE
    if _BUDGET_CACHE is not None:
        return _BUDGET_CACHE
    vmem_cap = None
    try:
        vmem_cap = int(pltpu.get_tpu_info().vmem_capacity_bytes)
    except Exception:
        vmem_cap = None
    if vmem_cap is None:
        try:
            kind = jax.devices()[0].device_kind.lower()
            vmem_cap = 64 * 2**20 if "v7" in kind else 128 * 2**20
        except Exception:
            vmem_cap = 64 * 2**20
    if vmem_cap >= 100 * 2**20:
        # v5e / v6e: big physical VMEM, single TensorCore
        b = dict(vmem_limit=96 * 2**20, gru_block=14 * 2**20, row_tile=1024, gru_seq=512)
    else:
        # v7x-like: 64 MiB VMEM, 2 TensorCores per chip
        b = dict(vmem_limit=48 * 2**20, gru_block=7 * 2**20, row_tile=512, gru_seq=256)
    _BUDGET_CACHE = b
    return b


def _cparams(*sem):
    return pltpu.CompilerParams(dimension_semantics=tuple(sem),
                                vmem_limit_bytes=_budgets()["vmem_limit"])


def _row_tile(n):
    cap = _budgets()["row_tile"]
    return n if n <= cap else cap


# ------------------------------------------------------------------------------ kernels
def _scalar_proj_kernel(x_ref, w_ref, b_ref, o_ref):
    # x_ref: [R, 1], w_ref/b_ref: [1, H]  ->  o_ref: [R, H]  (lane-dense output)
    o_ref[...] = x_ref[...] * w_ref[...] + b_ref[...]


def _linear_kernel(x_ref, w_ref, b_ref, o_ref):
    # x f32, w bf16 -> bf16 x bf16 MXU matmul, f32 accumulate
    o_ref[...] = (jnp.dot(x_ref[...].astype(BF16), w_ref[...],
                          preferred_element_type=jnp.float32) + b_ref[...])


def _linear_residual_kernel(res_ref, x_ref, w_ref, b_ref, o_ref):
    # o = res + x @ w + b   (fused residual, no extra HBM pass)
    o_ref[...] = (res_ref[...] + b_ref[...]
                  + jnp.dot(x_ref[...].astype(BF16), w_ref[...],
                            preferred_element_type=jnp.float32))


def _fused_time_residual_kernel(res_ref, at_ref, au_ref, ad_ref, w_ref, b_ref, o_ref):
    # o = res + concat([a_time, a_up, a_dn]) @ W_stacked + b  (one K=3H matmul)
    cat = jnp.concatenate([at_ref[...].astype(BF16),
                           au_ref[...].astype(BF16),
                           ad_ref[...].astype(BF16)], axis=-1)
    o_ref[...] = (res_ref[...] + b_ref[...]
                  + jnp.dot(cat, w_ref[...], preferred_element_type=jnp.float32))


def _freq_input_kernel(hf_ref, ht_ref, cc_ref, w_ref, b_ref, o_ref):
    # blocks: hf/ht/o: [1, R, H]; cc: [R, H] broadcast over the freq grid axis
    # o = h_f + h_t @ W_tf + b_tf + cond_c
    o_ref[0] = (hf_ref[0] + cc_ref[...] + b_ref[...]
                + jnp.dot(ht_ref[0].astype(BF16), w_ref[...],
                          preferred_element_type=jnp.float32))


def _gru_kernel(x_ref, wih_ref, bih_ref, whh_ref, bhh_ref, o_ref, h_scr,
                *, hidden, reverse, t_total, tt):
    # x_ref / o_ref: [tt, ns, H] (time tile x sequence tile); h_scr: [ns, H] f32 carry.
    # The input projection x_t @ W_ih runs per step on the tall [ns,H] tile (independent of
    # the h->gates->h chain, so it hides under the recurrence latency); no gi in HBM.
    @pl.when(pl.program_id(1) == 0)
    def _():
        h_scr[...] = jnp.zeros(h_scr.shape, h_scr.dtype)

    n_tt = pl.num_programs(1)
    pid = pl.program_id(1)
    tb = (n_tt - 1 - pid) if reverse else pid          # global time-block index
    valid = jnp.minimum(tt, t_total - tb * tt)         # ragged last block -> fewer steps

    def step(i, carry):
        t = (valid - 1 - i) if reverse else i
        gi = (jnp.dot(x_ref[t].astype(BF16), wih_ref[...],
                      preferred_element_type=jnp.float32) + bih_ref[...])
        h = h_scr[...]
        gh = (jnp.dot(h.astype(BF16), whh_ref[...],
                      preferred_element_type=jnp.float32) + bhh_ref[...])
        r = jax.nn.sigmoid(gi[:, :hidden] + gh[:, :hidden])
        z = jax.nn.sigmoid(gi[:, hidden:2 * hidden] + gh[:, hidden:2 * hidden])
        n = jnp.tanh(gi[:, 2 * hidden:] + r * gh[:, 2 * hidden:])
        h_new = (1.0 - z) * n + z * h
        h_scr[...] = h_new
        o_ref[t] = h_new
        return carry

    lax.fori_loop(0, valid, step, 0)


def _gmm_head_kernel(h_ref, w_ref, b_ref, mu_ref, std_ref, pi_ref, *, K, Kp):
    # h_ref: [R, H], w_ref: [H, 3*Kp] -> lane-dense [R, Kp] slabs (first K cols are real).
    # Head kept in f32; softmax uses an exact divide so pi rows sum to 1.
    theta = jnp.dot(h_ref[...], w_ref[...], preferred_element_type=jnp.float32) + b_ref[...]
    mu_ref[...] = theta[:, :Kp]
    std_ref[...] = jnp.exp(theta[:, Kp:2 * Kp])
    logit = theta[:, 2 * Kp:3 * Kp]
    lane = lax.broadcasted_iota(jnp.int32, logit.shape, 1)
    logit = jnp.where(lane < K, logit, -1e30)           # mask padded mixture slots
    m = jnp.max(logit, axis=-1, keepdims=True)
    e = jnp.exp(logit - m)
    pi_ref[...] = e / jnp.sum(e, axis=-1, keepdims=True)


# ----------------------------------------------------------------------------- wrappers
def scalar_proj(x_col, w, b):
    n = x_col.shape[0]
    h = w.shape[1]
    rt = _row_tile(n)
    return pl.pallas_call(
        _scalar_proj_kernel,
        out_shape=jax.ShapeDtypeStruct((n, h), jnp.float32),
        grid=(pl.cdiv(n, rt),),
        in_specs=[pl.BlockSpec((rt, 1), lambda i: (i, 0)),
                  pl.BlockSpec((1, h), lambda i: (0, 0)),
                  pl.BlockSpec((1, h), lambda i: (0, 0))],
        out_specs=pl.BlockSpec((rt, h), lambda i: (i, 0)),
        compiler_params=_cparams("parallel"),
    )(x_col, w, b)


def linear(x, w, b):
    n, din = x.shape
    dout = w.shape[1]
    rt = _row_tile(n)
    return pl.pallas_call(
        _linear_kernel,
        out_shape=jax.ShapeDtypeStruct((n, dout), jnp.float32),
        grid=(pl.cdiv(n, rt),),
        in_specs=[pl.BlockSpec((rt, din), lambda i: (i, 0)),
                  pl.BlockSpec((din, dout), lambda i: (0, 0)),
                  pl.BlockSpec((1, dout), lambda i: (0, 0))],
        out_specs=pl.BlockSpec((rt, dout), lambda i: (i, 0)),
        compiler_params=_cparams("parallel"),
    )(x, w, b)


def linear_residual(res, x, w, b):
    n, din = x.shape
    dout = w.shape[1]
    rt = _row_tile(n)
    return pl.pallas_call(
        _linear_residual_kernel,
        out_shape=jax.ShapeDtypeStruct((n, dout), jnp.float32),
        grid=(pl.cdiv(n, rt),),
        in_specs=[pl.BlockSpec((rt, dout), lambda i: (i, 0)),
                  pl.BlockSpec((rt, din), lambda i: (i, 0)),
                  pl.BlockSpec((din, dout), lambda i: (0, 0)),
                  pl.BlockSpec((1, dout), lambda i: (0, 0))],
        out_specs=pl.BlockSpec((rt, dout), lambda i: (i, 0)),
        compiler_params=_cparams("parallel"),
    )(res, x, w, b)


def fused_time_residual(res, a_time, a_up, a_dn, w_cat, b):
    n, h = res.shape
    rt = _row_tile(n)
    row_spec = pl.BlockSpec((rt, h), lambda i: (i, 0))
    return pl.pallas_call(
        _fused_time_residual_kernel,
        out_shape=jax.ShapeDtypeStruct((n, h), jnp.float32),
        grid=(pl.cdiv(n, rt),),
        in_specs=[row_spec, row_spec, row_spec, row_spec,
                  pl.BlockSpec((3 * h, h), lambda i: (0, 0)),
                  pl.BlockSpec((1, h), lambda i: (0, 0))],
        out_specs=row_spec,
        compiler_params=_cparams("parallel"),
    )(res, a_time, a_up, a_dn, w_cat, b)


def freq_delayed_input(h_f, h_t, cond_c, w_tf, b_tf):
    m, n, h = h_f.shape
    rt = _row_tile(n)
    row3 = pl.BlockSpec((1, rt, h), lambda mi, ri: (mi, ri, 0))
    return pl.pallas_call(
        _freq_input_kernel,
        out_shape=jax.ShapeDtypeStruct((m, n, h), jnp.float32),
        grid=(m, pl.cdiv(n, rt)),
        in_specs=[row3, row3,
                  pl.BlockSpec((rt, h), lambda mi, ri: (ri, 0)),
                  pl.BlockSpec((h, h), lambda mi, ri: (0, 0)),
                  pl.BlockSpec((1, h), lambda mi, ri: (0, 0))],
        out_specs=row3,
        compiler_params=_cparams("parallel", "parallel"),
    )(h_f, h_t, cond_c, w_tf, b_tf)


def gru_scan(x, cell, *, reverse=False):
    """GRU over axis 0 of x: [T, N, H] -> [T, N, H] (bf16 weights, f32 state)."""
    t_len, n_seq, h = x.shape
    b = _budgets()

    # sequence tile: tall tiles hide the recurrence latency; keep >=2 tiles (when there is
    # enough work) so both TensorCores on v7x-class chips get a share of the parallel axis.
    ns_cap = b["gru_seq"]
    if n_seq > ns_cap:
        ns = ns_cap
    elif n_seq >= 64:
        ns = _round_up((n_seq + 1) // 2, 8)
    else:
        ns = n_seq
    grid_s = pl.cdiv(n_seq, ns)

    # deep time tiles sized from the generation-aware block budget
    # (double-buffered f32 input block + double-buffered f32 output block per time step)
    per_t = ns * h * 4 * 4
    tt = max(1, min(t_len, b["gru_block"] // per_t))
    grid_t = pl.cdiv(t_len, tt)

    if reverse:
        idx = lambda s, t: (grid_t - 1 - t, s, 0)
    else:
        idx = lambda s, t: (t, s, 0)

    kern = functools.partial(_gru_kernel, hidden=h, reverse=reverse,
                             t_total=t_len, tt=tt)
    return pl.pallas_call(
        kern,
        out_shape=jax.ShapeDtypeStruct((t_len, n_seq, h), jnp.float32),
        grid=(grid_s, grid_t),
        in_specs=[pl.BlockSpec((tt, ns, h), idx),
                  pl.BlockSpec((h, 3 * h), lambda s, t: (0, 0)),
                  pl.BlockSpec((1, 3 * h), lambda s, t: (0, 0)),
                  pl.BlockSpec((h, 3 * h), lambda s, t: (0, 0)),
                  pl.BlockSpec((1, 3 * h), lambda s, t: (0, 0))],
        out_specs=pl.BlockSpec((tt, ns, h), idx),
        scratch_shapes=[pltpu.VMEM((ns, h), jnp.float32)],
        compiler_params=_cparams("parallel", "arbitrary"),
    )(x, cell["W_ih"], cell["b_ih"], cell["W_hh"], cell["b_hh"])


def gmm_head(h_rows, w, b, K, Kp):
    n, hdim = h_rows.shape
    rt = _row_tile(n)
    return pl.pallas_call(
        functools.partial(_gmm_head_kernel, K=K, Kp=Kp),
        out_shape=(jax.ShapeDtypeStruct((n, Kp), jnp.float32),) * 3,
        grid=(pl.cdiv(n, rt),),
        in_specs=[pl.BlockSpec((rt, hdim), lambda i: (i, 0)),
                  pl.BlockSpec((hdim, 3 * Kp), lambda i: (0, 0)),
                  pl.BlockSpec((1, 3 * Kp), lambda i: (0, 0))],
        out_specs=(pl.BlockSpec((rt, Kp), lambda i: (i, 0)),) * 3,
        compiler_params=_cparams("parallel"),
    )(h_rows, w, b)


# ---------------------------------------------------------------------- params / tier
def _dense(key, shape, scale=0.1, dtype=jnp.float32):
    return (scale * jax.random.normal(key, shape, jnp.float32)).astype(dtype)


def _gru_params(key, h):
    k = jax.random.split(key, 4)
    return dict(W_ih=_dense(k[0], (h, 3 * h), dtype=BF16),
                W_hh=_dense(k[1], (h, 3 * h), dtype=BF16),
                b_ih=_dense(k[2], (1, 3 * h)),
                b_hh=_dense(k[3], (1, 3 * h)))


def _init_tier(key, freq, layers, hidden, K):
    H = _round_up(max(hidden, 1), 128)   # pad hidden width to the 128-lane tile
    Kp = _round_up(max(K, 1), 128)       # lane-dense GMM head chunks
    keys = jax.random.split(key, 12 + layers)

    w_theta_raw = _dense(keys[6], (H, 3 * K))
    b_theta_raw = _dense(keys[7], (1, 3 * K))
    W_theta = jnp.zeros((H, 3 * Kp), jnp.float32)
    b_theta = jnp.zeros((1, 3 * Kp), jnp.float32)
    for c in range(3):
        W_theta = W_theta.at[:, c * Kp:c * Kp + K].set(w_theta_raw[:, c * K:(c + 1) * K])
        b_theta = b_theta.at[:, c * Kp:c * Kp + K].set(b_theta_raw[:, c * K:(c + 1) * K])

    p = dict(
        hidden=H, K=K, Kp=Kp, freq=freq,
        W_t0=_dense(keys[0], (1, H)), b_t0=_dense(keys[1], (1, H)),
        W_f0=_dense(keys[2], (1, H)), b_f0=_dense(keys[3], (1, H)),
        W_c0=_dense(keys[4], (freq, H), dtype=BF16), b_c0=_dense(keys[5], (1, H)),
        W_theta=W_theta, b_theta=b_theta,
        layers=[],
    )
    for l in range(layers):
        lk = jax.random.split(keys[12 + l], 16)
        p["layers"].append(dict(
            time=_gru_params(lk[0], H), fup=_gru_params(lk[1], H),
            fdn=_gru_params(lk[2], H), c=_gru_params(lk[3], H), f=_gru_params(lk[4], H),
            # stacked [W_t1; W_t2; W_t3] -> one (3H, H) weight for a single K=3H matmul
            W_t123=_dense(lk[5], (3 * H, H), dtype=BF16), b_t=_dense(lk[8], (1, H)),
            W_tf=_dense(lk[9], (H, H), dtype=BF16), b_tf=_dense(lk[10], (1, H)),
            W_cf=_dense(lk[11], (H, H), dtype=BF16), b_cf=_dense(lk[12], (1, H)),
            W_f=_dense(lk[13], (H, H), dtype=BF16), b_f=_dense(lk[14], (1, H)),
        ))
    return p


def _tier_forward(params, x):
    B, M, T = x.shape
    H = params["hidden"]
    K = params["K"]
    Kp = params["Kp"]
    assert M == params["freq"], (
        "input mel-bins (%d) must match tier freq (%d)" % (M, params["freq"]))
    BT = B * T

    # delayed (shifted) inputs — equivalent to F.pad(x, [1,-1]) / F.pad(x, [0,0,1,-1])
    x_tshift = jnp.pad(x, ((0, 0), (0, 0), (1, 0)))[:, :, :T]   # shift along time
    x_fshift = jnp.pad(x, ((0, 0), (1, 0), (0, 0)))[:, :M, :]   # shift along freq

    # canonical layouts: h_t / h_f: [M, B*T, H] (freq-scan ready), h_c: [B, T, H]
    xt_col = jnp.transpose(x_tshift, (1, 0, 2)).reshape(-1, 1)
    xf_col = jnp.transpose(x_fshift, (1, 0, 2)).reshape(-1, 1)
    h_t = scalar_proj(xt_col, params["W_t0"], params["b_t0"]).reshape(M, BT, H)
    h_f = scalar_proj(xf_col, params["W_f0"], params["b_f0"]).reshape(M, BT, H)
    frames = jnp.transpose(x_tshift, (0, 2, 1)).reshape(BT, M)
    h_c = linear(frames, params["W_c0"], params["b_c0"]).reshape(B, T, H)

    for lp in params["layers"]:
        # ---- time-delayed stack: RNN along time + along freq (up & down) ----
        xt = jnp.transpose(h_t.reshape(M, B, T, H), (2, 1, 0, 3)).reshape(T, B * M, H)
        a_time = gru_scan(xt, lp["time"])
        a_time = jnp.transpose(a_time.reshape(T, B, M, H), (2, 1, 0, 3)).reshape(M * BT, H)

        a_up = gru_scan(h_t, lp["fup"])
        a_dn = gru_scan(h_t, lp["fdn"], reverse=True)

        h_t = fused_time_residual(
            h_t.reshape(-1, H), a_time, a_up.reshape(-1, H), a_dn.reshape(-1, H),
            lp["W_t123"], lp["b_t"]).reshape(M, BT, H)

        # ---- centralized stack: RNN along time on the frame-level vector ----
        xc = jnp.transpose(h_c, (1, 0, 2))                                   # [T, B, H]
        a_c = gru_scan(xc, lp["c"])
        h_c = h_c + jnp.transpose(a_c, (1, 0, 2))

        # ---- frequency-delayed stack: RNN along freq, conditioned on h_t, h_c ----
        cond_c = linear(h_c.reshape(-1, H), lp["W_cf"], lp["b_cf"])          # [B*T, H]
        inp = freq_delayed_input(h_f, h_t, cond_c, lp["W_tf"], lp["b_tf"])   # [M, BT, H]
        a_f = gru_scan(inp, lp["f"])
        h_f = linear_residual(h_f.reshape(-1, H), a_f.reshape(-1, H),
                              lp["W_f"], lp["b_f"]).reshape(M, BT, H)

    # ---- GMM output head: mu, std=exp(.), pi=softmax(.) ----
    mu_p, std_p, pi_p = gmm_head(h_f.reshape(-1, H), params["W_theta"],
                                 params["b_theta"], K, Kp)
    shp = (M, B, T, K)
    mu = mu_p[:, :K].reshape(shp).transpose(1, 0, 2, 3)
    std = std_p[:, :K].reshape(shp).transpose(1, 0, 2, 3)
    pi = pi_p[:, :K].reshape(shp).transpose(1, 0, 2, 3)
    return mu, std, pi


class MelNetPallas:
    """Pallas-TPU port of MelNet: holds per-tier parameters, forward dispatches on tier."""

    def __init__(self, hp, key=jax.random.PRNGKey(1234)):
        self.hp = hp
        self.f_div = f_div[hp.model.tier]
        self.t_div = t_div[hp.model.tier]
        self.tiers = [None]
        for tier in range(1, hp.model.tier + 1):
            freq = hp.audio.n_mels // self.f_div * f_div[tier]
            tier_key = jax.random.fold_in(key, tier)
            self.tiers.append(
                _init_tier(tier_key, freq=freq, layers=hp.model.layers[tier - 1],
                           hidden=hp.model.hidden, K=hp.model.gmm)
            )

    def forward(self, x, tier_num):
        assert tier_num > 0, "tier_num should be larger than 0, got %d" % tier_num
        return _tier_forward(self.tiers[tier_num], x)

    def sample(self):
        raise NotImplementedError


# -------------------------------------------------------------------------------- main
if __name__ == "__main__":
    hp = types.SimpleNamespace(
        audio=types.SimpleNamespace(n_mels=8),
        model=types.SimpleNamespace(tier=1, layers=[2], hidden=32, gmm=4),
    )

    B, M, T = 2, hp.audio.n_mels, 16
    x = jax.random.normal(jax.random.PRNGKey(0), (B, M, T), jnp.float32)

    net = MelNetPallas(hp)
    mu, std, pi = net.forward(x, tier_num=1)
    jax.block_until_ready((mu, std, pi))

    K = hp.model.gmm
    assert mu.shape == (B, M, T, K)
    assert std.shape == (B, M, T, K)
    assert pi.shape == (B, M, T, K)
    assert bool(jnp.all(jnp.isfinite(mu)))
    assert bool(jnp.all(std > 0.0))
    assert bool(jnp.allclose(jnp.sum(pi, axis=-1), 1.0, atol=1e-2))
    print("KERNEL_OK")
</pallas_src>

<mosaic_0001>
module attributes {stable_mosaic.version = 11 : i64} {
  func.func @_scalar_proj_kernel(%arg0: i32, %arg1: memref<256x1xf32, #tpu.memory_space<vmem>>, %arg2: memref<1x128xf32, #tpu.memory_space<vmem>>, %arg3: memref<1x128xf32, #tpu.memory_space<vmem>>, %arg4: memref<256x128xf32, #tpu.memory_space<vmem>>) attributes {dimension_semantics = [#tpu.dimension_semantics<parallel>], iteration_bounds = array<i64: 1>, scalar_prefetch = 0 : i64, scratch_operands = 0 : i64, tpu.core_type = #tpu.core_type<tc>, window_params = [{transform_indices = @transform_0, window_bounds = array<i64: 256, 1>}, {pipeline_mode = #tpu.pipeline_mode<synchronous>, transform_indices = @transform_1, window_bounds = array<i64: 1, 128>}, {pipeline_mode = #tpu.pipeline_mode<synchronous>, transform_indices = @transform_2, window_bounds = array<i64: 1, 128>}, {transform_indices = @transform_3, window_bounds = array<i64: 256, 128>}]} {
    %c0 = arith.constant 0 : index
    %c0_0 = arith.constant 0 : index
    %0 = vector.load %arg1[%c0, %c0_0] : memref<256x1xf32, #tpu.memory_space<vmem>>, vector<256x1xf32>
    %c0_1 = arith.constant 0 : index
    %c0_2 = arith.constant 0 : index
    %1 = vector.load %arg2[%c0_1, %c0_2] : memref<1x128xf32, #tpu.memory_space<vmem>>, vector<1x128xf32>
    %2 = vector.broadcast %0 : vector<256x1xf32> to vector<256x128xf32>
    %3 = vector.broadcast %1 : vector<1x128xf32> to vector<256x128xf32>
    %4 = arith.mulf %2, %3 : vector<256x128xf32>
    %c0_3 = arith.constant 0 : index
    %c0_4 = arith.constant 0 : index
    %5 = vector.load %arg3[%c0_3, %c0_4] : memref<1x128xf32, #tpu.memory_space<vmem>>, vector<1x128xf32>
    %6 = vector.broadcast %5 : vector<1x128xf32> to vector<256x128xf32>
    %7 = arith.addf %4, %6 : vector<256x128xf32>
    %c0_5 = arith.constant 0 : index
    %c0_6 = arith.constant 0 : index
    %8 = vector.load %arg4[%c0_5, %c0_6] : memref<256x128xf32, #tpu.memory_space<vmem>>, vector<256x128xf32>
    tpu.vector_store %arg4[%c0_5, %c0_6], %7 {strides = array<i32>} : memref<256x128xf32, #tpu.memory_space<vmem>>, vector<256x128xf32>,
    return
  }
  func.func @transform_0(%arg0: i32) -> (i32, i32) {
    %c0_i32 = arith.constant 0 : i32
    %c0_i32_0 = arith.constant 0 : i32
    return %arg0, %c0_i32 : i32, i32
  }
  func.func @transform_1(%arg0: i32) -> (i32, i32) {
    %c0_i32 = arith.constant 0 : i32
    %c0_i32_0 = arith.constant 0 : i32
    %c0_i32_1 = arith.constant 0 : i32
    return %c0_i32, %c0_i32_0 : i32, i32
  }
  func.func @transform_2(%arg0: i32) -> (i32, i32) {
    %c0_i32 = arith.constant 0 : i32
    %c0_i32_0 = arith.constant 0 : i32
    %c0_i32_1 = arith.constant 0 : i32
    return %c0_i32, %c0_i32_0 : i32, i32
  }
  func.func @transform_3(%arg0: i32) -> (i32, i32) {
    %c0_i32 = arith.constant 0 : i32
    %c0_i32_0 = arith.constant 0 : i32
    return %arg0, %c0_i32 : i32, i32
  }
}

</mosaic_0001>

<llo_original>
// kernel: tpu_custom_call.1
$region0: #{tpu_custom_call.1}
  #allocation0 [shape = 'u32[]', space=smem, size = 0x4, offset = 0x4, fixed_abs, tag = 'smem constant byte address 0x4 - core index']
  #allocation1 [shape = 'u32[144,128]{1,0:T(1,128)}', space=vmem, size = 0x12000, scoped, tag = 'internal scratch']
  %s0 = inlined_call_operand.vmem [shape: f32[256,1], index: 0, kind: input, shape index: {}]
  %s1 = inlined_call_operand.vmem [shape: f32[1,128], index: 1, kind: input, shape index: {}]
  %s2 = inlined_call_operand.vmem [shape: f32[1,128], index: 2, kind: input, shape index: {}]
  %s3 = inlined_call_operand.hbm [shape: f32[256,128], index: 3, kind: output, shape index: {}]
  %s4 = sld [smem:[#allocation0]]
  $region22: #{tpu_custom_call.1} parent=0
    _
  %s6 = ssub.s32 1, %s4
  %s7 = scalar_select 0, %s6, %s4
  $region1: #{tpu_custom_call.1} parent=0
    #allocation2 [shape = 'u8[131072]{0}', space=vmem, size = 0x20000, scoped, tag = 'output window, operand 0, single buffered']
    #allocation3 [shape = 's32[1]{0}', space=sflag, size = 0x4, scoped, tag = 'scoped memory for tpu_custom_call.1']
    %8 = vsyncpa [#allocation3], 0
    // Predicated region
    $region2: #{tpu_custom_call.1} parent=1 // pred_check
      _
    $region3: #{tpu_custom_call.1} parent=1 // pred_check_branch
      %10 = sbr.rel (0) target = $region5
    $region4: #{tpu_custom_call.1} parent=1 // pred_region
      _
    $region5: #{tpu_custom_call.1} parent=1 // pred_fallthru
      _
    // Predicated region
    $region6: #{tpu_custom_call.1} parent=1 // pred_check
      _
    $region7: #{tpu_custom_call.1} parent=1 // pred_check_branch
      %12 = sbr.rel (0) target = $region9
    $region8: #{tpu_custom_call.1} parent=1 // pred_region
      _
    $region9: #{tpu_custom_call.1} parent=1 // pred_fallthru
      _
    // Predicated region
    $region10: #{tpu_custom_call.1} parent=1 // pred_check
      _
    $region11: #{tpu_custom_call.1} parent=1 // pred_check_branch
      %14 = sbr.rel (0) target = $region13
    $region12: #{tpu_custom_call.1} parent=1 // pred_region
      _
    $region13: #{tpu_custom_call.1} parent=1 // pred_fallthru
      _
    %v15 = vld [vmem:[%s0] sm:$0xff]
    %v16 = vld [vmem:[%s0 + $0x8] sm:$0xff]
    %v17 = vld [vmem:[%s0 + $0x10] sm:$0xff]
    %v18 = vld [vmem:[%s0 + $0x18] sm:$0xff]
    %v19 = vld [vmem:[%s0 + $0x20] sm:$0xff]
    %v20 = vld [vmem:[%s0 + $0x28] sm:$0xff]
    %v21 = vld [vmem:[%s0 + $0x30] sm:$0xff]
    %v22 = vld [vmem:[%s0 + $0x38] sm:$0xff]
    %v23 = vld [vmem:[%s0 + $0x40] sm:$0xff]
    %v24 = vld [vmem:[%s0 + $0x48] sm:$0xff]
    %v25 = vld [vmem:[%s0 + $0x50] sm:$0xff]
    %v26 = vld [vmem:[%s0 + $0x58] sm:$0xff]
    %v27 = vld [vmem:[%s0 + $0x60] sm:$0xff]
    %v28 = vld [vmem:[%s0 + $0x68] sm:$0xff]
    %v29 = vld [vmem:[%s0 + $0x70] sm:$0xff]
    %v30 = vld [vmem:[%s0 + $0x78] sm:$0xff]
    %v31 = vld [vmem:[%s0 + $0x80] sm:$0xff]
    %v32 = vld [vmem:[%s0 + $0x88] sm:$0xff]
    %v33 = vld [vmem:[%s0 + $0x90] sm:$0xff]
    %v34 = vld [vmem:[%s0 + $0x98] sm:$0xff]
    %v35 = vld [vmem:[%s0 + $0xa0] sm:$0xff]
    %v36 = vld [vmem:[%s0 + $0xa8] sm:$0xff]
    %v37 = vld [vmem:[%s0 + $0xb0] sm:$0xff]
    %v38 = vld [vmem:[%s0 + $0xb8] sm:$0xff]
    %v39 = vld [vmem:[%s0 + $0xc0] sm:$0xff]
    %v40 = vld [vmem:[%s0 + $0xc8] sm:$0xff]
    %v41 = vld [vmem:[%s0 + $0xd0] sm:$0xff]
    %v42 = vld [vmem:[%s0 + $0xd8] sm:$0xff]
    %v43 = vld [vmem:[%s0 + $0xe0] sm:$0xff]
    %v44 = vld [vmem:[%s0 + $0xe8] sm:$0xff]
    %v45 = vld [vmem:[%s0 + $0xf0] sm:$0xff]
    %v46 = vld [vmem:[%s0 + $0xf8] sm:$0xff]
    %v47 = vld [vmem:[%s1] sm:$0x1]
    %49 = vset.pattern.permute.xlu0 0
    %50 = vperm.xlu0 %49, %v15
    %v51 = vpop.permute.xlu0 %50
    %54 = vset.pattern.permute.xlu0 0
    %55 = vperm.xlu0 %54, %v16
    %v56 = vpop.permute.xlu0 %55
    %59 = vset.pattern.permute.xlu0 0
    %60 = vperm.xlu0 %59, %v17
    %v61 = vpop.permute.xlu0 %60
    %64 = vset.pattern.permute.xlu0 0
    %65 = vperm.xlu0 %64, %v18
    %v66 = vpop.permute.xlu0 %65
    %69 = vset.pattern.permute.xlu0 0
    %70 = vperm.xlu0 %69, %v19
    %v71 = vpop.permute.xlu0 %70
    %74 = vset.pattern.permute.xlu0 0
    %75 = vperm.xlu0 %74, %v20
    %v76 = vpop.permute.xlu0 %75
    %79 = vset.pattern.permute.xlu0 0
    %80 = vperm.xlu0 %79, %v21
    %v81 = vpop.permute.xlu0 %80
    %84 = vset.pattern.permute.xlu0 0
    %85 = vperm.xlu0 %84, %v22
    %v86 = vpop.permute.xlu0 %85
    %89 = vset.pattern.permute.xlu0 0
    %90 = vperm.xlu0 %89, %v23
    %v91 = vpop.permute.xlu0 %90
    %94 = vset.pattern.permute.xlu0 0
    %95 = vperm.xlu0 %94, %v24
    %v96 = vpop.permute.xlu0 %95
    %99 = vset.pattern.permute.xlu0 0
    %100 = vperm.xlu0 %99, %v25
    %v101 = vpop.permute.xlu0 %100
    %104 = vset.pattern.permute.xlu0 0
    %105 = vperm.xlu0 %104, %v26
    %v106 = vpop.permute.xlu0 %105
    %109 = vset.pattern.permute.xlu0 0
    %110 = vperm.xlu0 %109, %v27
    %v111 = vpop.permute.xlu0 %110
    %114 = vset.pattern.permute.xlu0 0
    %115 = vperm.xlu0 %114, %v28
    %v116 = vpop.permute.xlu0 %115
    %119 = vset.pattern.permute.xlu0 0
    %120 = vperm.xlu0 %119, %v29
    %v121 = vpop.permute.xlu0 %120
    %124 = vset.pattern.permute.xlu0 0
    %125 = vperm.xlu0 %124, %v30
    %v126 = vpop.permute.xlu0 %125
    %129 = vset.pattern.permute.xlu0 0
    %130 = vperm.xlu0 %129, %v31
    %v131 = vpop.permute.xlu0 %130
    %134 = vset.pattern.permute.xlu0 0
    %135 = vperm.xlu0 %134, %v32
    %v136 = vpop.permute.xlu0 %135
    %139 = vset.pattern.permute.xlu0 0
    %140 = vperm.xlu0 %139, %v33
    %v141 = vpop.permute.xlu0 %140
    %144 = vset.pattern.permute.xlu0 0
    %145 = vperm.xlu0 %144, %v34
    %v146 = vpop.permute.xlu0 %145
    %149 = vset.pattern.permute.xlu0 0
    %150 = vperm.xlu0 %149, %v35
    %v151 = vpop.permute.xlu0 %150
    %154 = vset.pattern.permute.xlu0 0
    %155 = vperm.xlu0 %154, %v36
    %v156 = vpop.permute.xlu0 %155
    %159 = vset.pattern.permute.xlu0 0
    %160 = vperm.xlu0 %159, %v37
    %v161 = vpop.permute.xlu0 %160
    %164 = vset.pattern.permute.xlu0 0
    %165 = vperm.xlu0 %164, %v38
    %v166 = vpop.permute.xlu0 %165
    %169 = vset.pattern.permute.xlu0 0
    %170 = vperm.xlu0 %169, %v39
    %v171 = vpop.permute.xlu0 %170
    %174 = vset.pattern.permute.xlu0 0
    %175 = vperm.xlu0 %174, %v40
    %v176 = vpop.permute.xlu0 %175
    %179 = vset.pattern.permute.xlu0 0
    %180 = vperm.xlu0 %179, %v41
    %v181 = vpop.permute.xlu0 %180
    %184 = vset.pattern.permute.xlu0 0
    %185 = vperm.xlu0 %184, %v42
    %v186 = vpop.permute.xlu0 %185
    %189 = vset.pattern.permute.xlu0 0
    %190 = vperm.xlu0 %189, %v43
    %v191 = vpop.permute.xlu0 %190
    %194 = vset.pattern.permute.xlu0 0
    %195 = vperm.xlu0 %194, %v44
    %v196 = vpop.permute.xlu0 %195
    %199 = vset.pattern.permute.xlu0 0
    %200 = vperm.xlu0 %199, %v45
    %v201 = vpop.permute.xlu0 %200
    %204 = vset.pattern.permute.xlu0 0
    %205 = vperm.xlu0 %204, %v46
    %v206 = vpop.permute.xlu0 %205
    %v209 = vlaneseq
    %v210 = vshrl.u32 %v209, 7
    %v211 = vsub.s32 0, %v210
    %v212 = vrot.slane %v47, %v211
    %v214 = vmul.f32 %v51, %v212
    %v215 = vmul.f32 %v56, %v212
    %v216 = vmul.f32 %v61, %v212
    %v217 = vmul.f32 %v66, %v212
    %v218 = vmul.f32 %v71, %v212
    %v219 = vmul.f32 %v76, %v212
    %v220 = vmul.f32 %v81, %v212
    %v221 = vmul.f32 %v86, %v212
    %v222 = vmul.f32 %v91, %v212
    %v223 = vmul.f32 %v96, %v212
    %v224 = vmul.f32 %v101, %v212
    %v225 = vmul.f32 %v106, %v212
    %v226 = vmul.f32 %v111, %v212
    %v227 = vmul.f32 %v116, %v212
    %v228 = vmul.f32 %v121, %v212
    %v229 = vmul.f32 %v126, %v212
    %v230 = vmul.f32 %v131, %v212
    %v231 = vmul.f32 %v136, %v212
    %v232 = vmul.f32 %v141, %v212
    %v233 = vmul.f32 %v146, %v212
    %v234 = vmul.f32 %v151, %v212
    %v235 = vmul.f32 %v156, %v212
    %v236 = vmul.f32 %v161, %v212
    %v237 = vmul.f32 %v166, %v212
    %v238 = vmul.f32 %v171, %v212
    %v239 = vmul.f32 %v176, %v212
    %v240 = vmul.f32 %v181, %v212
    %v241 = vmul.f32 %v186, %v212
    %v242 = vmul.f32 %v191, %v212
    %v243 = vmul.f32 %v196, %v212
    %v244 = vmul.f32 %v201, %v212
    %v245 = vmul.f32 %v206, %v212
    %v246 = vld [vmem:[%s2] sm:$0x1]
    %v248 = vlaneseq
    %v249 = vshrl.u32 %v248, 7
    %v250 = vsub.s32 0, %v249
    %v251 = vrot.slane %v246, %v250
    %v253 = vadd.f32 %v214, %v251
    %v254 = vadd.f32 %v215, %v251
    %v255 = vadd.f32 %v216, %v251
    %v256 = vadd.f32 %v217, %v251
    %v257 = vadd.f32 %v218, %v251
    %v258 = vadd.f32 %v219, %v251
    %v259 = vadd.f32 %v220, %v251
    %v260 = vadd.f32 %v221, %v251
    %v261 = vadd.f32 %v222, %v251
    %v262 = vadd.f32 %v223, %v251
    %v263 = vadd.f32 %v224, %v251
    %v264 = vadd.f32 %v225, %v251
    %v265 = vadd.f32 %v226, %v251
    %v266 = vadd.f32 %v227, %v251
    %v267 = vadd.f32 %v228, %v251
    %v268 = vadd.f32 %v229, %v251
    %v269 = vadd.f32 %v230, %v251
    %v270 = vadd.f32 %v231, %v251
    %v271 = vadd.f32 %v232, %v251
    %v272 = vadd.f32 %v233, %v251
    %v273 = vadd.f32 %v234, %v251
    %v274 = vadd.f32 %v235, %v251
    %v275 = vadd.f32 %v236, %v251
    %v276 = vadd.f32 %v237, %v251
    %v277 = vadd.f32 %v238, %v251
    %v278 = vadd.f32 %v239, %v251
    %v279 = vadd.f32 %v240, %v251
    %v280 = vadd.f32 %v241, %v251
    %v281 = vadd.f32 %v242, %v251
    %v282 = vadd.f32 %v243, %v251
    %v283 = vadd.f32 %v244, %v251
    %v284 = vadd.f32 %v245, %v251
    %285 = vst [vmem:[#allocation2] sm:$0xff] %v253
    %286 = vst [vmem:[#allocation2 + $0x8] sm:$0xff] %v254
    %287 = vst [vmem:[#allocation2 + $0x10] sm:$0xff] %v255
    %288 = vst [vmem:[#allocation2 + $0x18] sm:$0xff] %v256
    %289 = vst [vmem:[#allocation2 + $0x20] sm:$0xff] %v257
    %290 = vst [vmem:[#allocation2 + $0x28] sm:$0xff] %v258
    %291 = vst [vmem:[#allocation2 + $0x30] sm:$0xff] %v259
    %292 = vst [vmem:[#allocation2 + $0x38] sm:$0xff] %v260
    %293 = vst [vmem:[#allocation2 + $0x40] sm:$0xff] %v261
    %294 = vst [vmem:[#allocation2 + $0x48] sm:$0xff] %v262
    %295 = vst [vmem:[#allocation2 + $0x50] sm:$0xff] %v263
    %296 = vst [vmem:[#allocation2 + $0x58] sm:$0xff] %v264
    %297 = vst [vmem:[#allocation2 + $0x60] sm:$0xff] %v265
    %298 = vst [vmem:[#allocation2 + $0x68] sm:$0xff] %v266
    %299 = vst [vmem:[#allocation2 + $0x70] sm:$0xff] %v267
    %300 = vst [vmem:[#allocation2 + $0x78] sm:$0xff] %v268
    %301 = vst [vmem:[#allocation2 + $0x80] sm:$0xff] %v269
    %302 = vst [vmem:[#allocation2 + $0x88] sm:$0xff] %v270
    %303 = vst [vmem:[#allocation2 + $0x90] sm:$0xff] %v271
    %304 = vst [vmem:[#allocation2 + $0x98] sm:$0xff] %v272
    %305 = vst [vmem:[#allocation2 + $0xa0] sm:$0xff] %v273
    %306 = vst [vmem:[#allocation2 + $0xa8] sm:$0xff] %v274
    %307 = vst [vmem:[#allocation2 + $0xb0] sm:$0xff] %v275
    %308 = vst [vmem:[#allocation2 + $0xb8] sm:$0xff] %v276
    %309 = vst [vmem:[#allocation2 + $0xc0] sm:$0xff] %v277
    %310 = vst [vmem:[#allocation2 + $0xc8] sm:$0xff] %v278
    %311 = vst [vmem:[#allocation2 + $0xd0] sm:$0xff] %v279
    %312 = vst [vmem:[#allocation2 + $0xd8] sm:$0xff] %v280
    %313 = vst [vmem:[#allocation2 + $0xe0] sm:$0xff] %v281
    %314 = vst [vmem:[#allocation2 + $0xe8] sm:$0xff] %v282
    %315 = vst [vmem:[#allocation2 + $0xf0] sm:$0xff] %v283
    %316 = vst [vmem:[#allocation2 + $0xf8] sm:$0xff] %v284
    // Predicated region
    $region14: #{tpu_custom_call.1} parent=1 // pred_check
      _
    $region15: #{tpu_custom_call.1} parent=1 // pred_check_branch
      %318 = sbr.rel (0) target = $region17
    $region16: #{tpu_custom_call.1} parent=1 // pred_region
      %s320 = ssub.s32 4096, 4096
      %321 = vsyncadd [#allocation3], %s320
      %s322 = sshll.u32 [#allocation2], 4
      %s323 = int_to_ptr.vmem [resolvable:$true] %s322
      %328 = dma.vmem_to_hbm [thread:$0]  %s323, 4096, %s3, [#allocation3], 128, 128, 8
    $region17: #{tpu_custom_call.1} parent=1 // pred_fallthru
      _
    // Predicated region
    $region18: #{tpu_custom_call.1} parent=1 // pred_check
      _
    $region19: #{tpu_custom_call.1} parent=1 // pred_check_branch
      %330 = sbr.rel (0) target = $region21
    $region20: #{tpu_custom_call.1} parent=1 // pred_region
      %331 = dma.done [#allocation3], 4096
    $region21: #{tpu_custom_call.1} parent=1 // pred_fallthru
      _
    %332 = vsyncpa [#allocation3], 1

</llo_original>
